<compile_context>
chip_gen: v7x
topology: tpu7x:2x2x1
jax: 0.10.0
libtpu: 0.0.40
codegen_flags: <defaults>
</compile_context>

<pallas_src>
import jax
import jax.numpy as jnp
import numpy as np
from jax.experimental import pallas as pl
from jax.experimental.pallas import tpu as pltpu


def gabor_kernel(xa_ref, rhs_ref, o_ref):
    # xa_ref:  (TM, D+2)     [x, ||x||^2, 1]
    # rhs_ref: (D+2, 2*TN)   [gamma*mu;-g/2;-g/2*||mu||^2 | W;0;b] for this tile
    # o_ref:   (TM, TN)
    tn = o_ref.shape[1]
    both = jnp.dot(xa_ref[...], rhs_ref[...], preferred_element_type=jnp.float32)
    # tn is a multiple of 128 -> lane-aligned slices, no relayout.
    o_ref[...] = (jnp.exp(both[:, :tn]) * jnp.sin(both[:, tn:])).astype(o_ref.dtype)


def _round_up(v, m):
    return ((v + m - 1) // m) * m


def prepare_gabor_params(mu, gamma, weight, bias, *, tn=512):
    """Parameter-only prep: build the fused, transposed weight stack once and
    cache it across forward calls (pure overhead if redone per call)."""
    O, D = mu.shape
    tn = _round_up(min(tn, _round_up(O, 128)), 128)
    o_pad = _round_up(O, tn)
    f32 = jnp.float32

    mup = jnp.pad(mu.astype(f32), ((0, o_pad - O), (0, 0)))
    gp = jnp.pad(gamma.astype(f32), (0, o_pad - O))
    wp = jnp.pad(weight.astype(f32), ((0, o_pad - O), (0, 0)))
    bp = jnp.pad(bias.astype(f32), (0, o_pad - O))

    half_g = -0.5 * gp                                             # -gamma/2
    # mu-half columns: rows [gamma*mu (D) ; -gamma/2 ; -gamma/2*||mu||^2]
    mu_side = jnp.concatenate(
        [(gp[:, None] * mup).T,
         half_g[None, :],
         (half_g * jnp.sum(mup * mup, axis=1))[None, :]], axis=0)  # (D+2, o_pad)
    # W-half columns: rows [W (D) ; 0 ; b]
    w_side = jnp.concatenate(
        [wp.T, jnp.zeros((1, o_pad), f32), bp[None, :]], axis=0)   # (D+2, o_pad)

    d_aug = D + 2
    g = o_pad // tn
    # Interleave per output tile so one (D+2, 2*tn) block feeds a single dot.
    # NOTE: this layout bakes in tn; re-run prep if a different tn is wanted
    # (e.g. tn=128/256 to give v7x's two cores work on very small problems).
    rhs = jnp.stack(
        [mu_side.reshape(d_aug, g, tn), w_side.reshape(d_aug, g, tn)], axis=2
    ).reshape(d_aug, 2 * o_pad)

    return {"rhs": rhs, "tn": tn, "o_pad": o_pad, "O": O, "D": D}


def gabor_forward(x, params, *, tm=1024, out_dtype=None):
    N, D = x.shape
    assert D == params["D"], "in_features mismatch with prepared params"
    O, tn, o_pad = params["O"], params["tn"], params["o_pad"]
    rhs = params["rhs"]
    out_dtype = out_dtype or x.dtype
    d_aug = D + 2

    # Tile clamping: sublane-aligned rows (16 for bf16 output writeback).
    min_tm = 16 if out_dtype == jnp.bfloat16 else 8
    tm = _round_up(min(tm, _round_up(N, min_tm)), min_tm)
    # v7x megacore: keep the grid at >=2 cells when the problem allows it.
    while ((N + tm - 1) // tm) * (o_pad // tn) < 2 and tm > min_tm:
        tm = max(min_tm, _round_up(tm // 2, min_tm))
    n_pad = _round_up(N, tm)

    # Per-call input augmentation: [x, ||x||^2, 1]; cheap zero row-pad so the
    # (discarded) out-of-range rows can never generate inf/nan lanes.
    xf = x.astype(jnp.float32)
    xa = jnp.concatenate(
        [xf, jnp.sum(xf * xf, axis=1, keepdims=True), jnp.ones((N, 1), jnp.float32)],
        axis=1)
    xa = jnp.pad(xa, ((0, n_pad - N), (0, 0)))

    grid = (n_pad // tm, o_pad // tn)
    out = pl.pallas_call(
        gabor_kernel,
        # True output shape: Pallas clips partial last blocks -> no post-slice copy.
        out_shape=jax.ShapeDtypeStruct((N, O), out_dtype),
        grid_spec=pl.GridSpec(
            grid=grid,
            in_specs=[
                pl.BlockSpec((tm, d_aug), lambda i, j: (i, 0)),      # x_aug
                pl.BlockSpec((d_aug, 2 * tn), lambda i, j: (0, j)),  # fused weights
            ],
            out_specs=pl.BlockSpec((tm, tn), lambda i, j: (i, j)),
        ),
        compiler_params=pltpu.CompilerParams(
            dimension_semantics=("parallel", "parallel"),
            vmem_limit_bytes=32 * 1024 * 1024,
        ),
    )(xa, rhs)
    return out


def gabor_reference(x, mu, gamma, weight, bias):
    norm = (jnp.sum(x ** 2, axis=1, keepdims=True)
            + jnp.sum(mu ** 2, axis=1)[None, :]
            - 2.0 * x @ mu.T)
    lin = x @ weight.T + bias[None, :]
    return jnp.exp(-gamma[None, :] / 2.0 * norm) * jnp.sin(lin)


if __name__ == "__main__":
    in_features = 32
    out_features = 128
    batch = 8
    alpha, beta = 1.0, 1.0

    key = jax.random.PRNGKey(0)
    k_x, k_mu, k_gamma, k_w, k_b = jax.random.split(key, 5)

    # Deterministic parameter init mirroring GaborLayer.__init__:
    mu = jax.random.uniform(k_mu, (out_features, in_features),
                            minval=-1.0, maxval=1.0, dtype=jnp.float32)
    gamma = jax.random.gamma(k_gamma, alpha, (out_features,),
                             dtype=jnp.float32) / beta
    bound = 1.0 / np.sqrt(in_features)   # nn.Linear default init bound
    weight = jax.random.uniform(k_w, (out_features, in_features),
                                minval=-bound, maxval=bound, dtype=jnp.float32)
    weight = weight * 128.0 * jnp.sqrt(gamma)[:, None]
    bias = jax.random.uniform(k_b, (out_features,),
                              minval=-np.pi, maxval=np.pi, dtype=jnp.float32)

    x = jax.random.normal(k_x, (batch, in_features), dtype=jnp.float32)

    params = prepare_gabor_params(mu, gamma, weight, bias)   # built once, reusable
    out = gabor_forward(x, params)                            # f32 out; pass
    out = jax.block_until_ready(out)                          # out_dtype=bf16 on v5e

    ref = gabor_reference(x, mu, gamma, weight, bias)
    np.testing.assert_allclose(np.asarray(out), np.asarray(ref),
                               rtol=1e-4, atol=1e-5)
    print("KERNEL_OK")
</pallas_src>

<mosaic_0001>
module attributes {stable_mosaic.version = 11 : i64} {
  func.func @gabor_kernel(%arg0: i32, %arg1: i32, %arg2: memref<8x34xf32, #tpu.memory_space<vmem>>, %arg3: memref<34x256xf32, #tpu.memory_space<vmem>>, %arg4: memref<8x128xf32, #tpu.memory_space<vmem>>) attributes {dimension_semantics = [#tpu.dimension_semantics<parallel>, #tpu.dimension_semantics<parallel>], iteration_bounds = array<i64: 1, 1>, scalar_prefetch = 0 : i64, scratch_operands = 0 : i64, tpu.core_type = #tpu.core_type<tc>, window_params = [{transform_indices = @transform_0, window_bounds = array<i64: 8, 34>}, {transform_indices = @transform_1, window_bounds = array<i64: 34, 256>}, {transform_indices = @transform_2, window_bounds = array<i64: 8, 128>}]} {
    %c0 = arith.constant 0 : index
    %c0_0 = arith.constant 0 : index
    %0 = vector.load %arg2[%c0, %c0_0] : memref<8x34xf32, #tpu.memory_space<vmem>>, vector<8x34xf32>
    %c0_1 = arith.constant 0 : index
    %c0_2 = arith.constant 0 : index
    %1 = vector.load %arg3[%c0_1, %c0_2] : memref<34x256xf32, #tpu.memory_space<vmem>>, vector<34x256xf32>
    %cst = arith.constant dense<0.000000e+00> : vector<8x256xf32>
    %2 = tpu.matmul %0, %1, %cst {dimension_numbers = #tpu.dot_dimension_numbers<[1], [0], [0], [1], [0, 0, 1, 1], [], []>} : vector<8x34xf32>, vector<34x256xf32>, vector<8x256xf32> -> vector<8x256xf32>
    %3 = vector.extract_strided_slice %2 {offsets = [0, 0], sizes = [8, 128], strides = [1, 1]} : vector<8x256xf32> to vector<8x128xf32>
    %4 = math.exp %3 : vector<8x128xf32>
    %5 = vector.extract_strided_slice %2 {offsets = [0, 128], sizes = [8, 128], strides = [1, 1]} : vector<8x256xf32> to vector<8x128xf32>
    %6 = math.sin %5 : vector<8x128xf32>
    %7 = arith.mulf %4, %6 : vector<8x128xf32>
    %c0_3 = arith.constant 0 : index
    %c0_4 = arith.constant 0 : index
    %8 = vector.load %arg4[%c0_3, %c0_4] : memref<8x128xf32, #tpu.memory_space<vmem>>, vector<8x128xf32>
    tpu.vector_store %arg4[%c0_3, %c0_4], %7 {strides = array<i32>} : memref<8x128xf32, #tpu.memory_space<vmem>>, vector<8x128xf32>,
    return
  }
  func.func @transform_0(%arg0: i32, %arg1: i32) -> (i32, i32) {
    %c0_i32 = arith.constant 0 : i32
    %c0_i32_0 = arith.constant 0 : i32
    return %arg0, %c0_i32 : i32, i32
  }
  func.func @transform_1(%arg0: i32, %arg1: i32) -> (i32, i32) {
    %c0_i32 = arith.constant 0 : i32
    %c0_i32_0 = arith.constant 0 : i32
    return %c0_i32, %arg1 : i32, i32
  }
  func.func @transform_2(%arg0: i32, %arg1: i32) -> (i32, i32) {
    %c0_i32 = arith.constant 0 : i32
    return %arg0, %arg1 : i32, i32
  }
}

</mosaic_0001>

<llo_original>
// kernel: tpu_custom_call.1
$region0: #{tpu_custom_call.1}
  #allocation0 [shape = 'u32[]', space=smem, size = 0x4, offset = 0x4, fixed_abs, tag = 'smem constant byte address 0x4 - core index']
  #allocation1 [shape = 'u32[144,128]{1,0:T(1,128)}', space=vmem, size = 0x12000, scoped, tag = 'internal scratch']
  %s0 = inlined_call_operand.hbm [shape: f32[8,34], index: 0, kind: input, shape index: {}]
  %s1 = inlined_call_operand.hbm [shape: f32[34,256], index: 1, kind: input, shape index: {}]
  %s2 = inlined_call_operand.hbm [shape: f32[8,128], index: 2, kind: output, shape index: {}]
  %s3 = sld [smem:[#allocation0]]
  $region26: #{tpu_custom_call.1} parent=0
    _
  %s5 = ssub.s32 1, %s3
  %s6 = scalar_select 0, %s5, %s3
  $region1: #{tpu_custom_call.1} parent=0
    #allocation2 [shape = 'u8[4096]{0}', space=vmem, size = 0x1000, scoped, tag = 'input window, operand 0, single buffered']
    #allocation3 [shape = 's32[1]{0}', space=sflag, size = 0x4, scoped, tag = 'scoped memory for tpu_custom_call.1']
    #allocation4 [shape = 's32[1]{0}', space=sflag, size = 0x4, scoped, tag = 'scoped memory for tpu_custom_call.1']
    #allocation5 [shape = 'u8[40960]{0}', space=vmem, size = 0xa000, scoped, tag = 'input window, operand 1, single buffered']
    #allocation6 [shape = 's32[1]{0}', space=sflag, size = 0x4, scoped, tag = 'scoped memory for tpu_custom_call.1']
    #allocation7 [shape = 'u8[4096]{0}', space=vmem, size = 0x1000, scoped, tag = 'output window, operand 0, single buffered']
    %7 = vsyncpa [#allocation3], 0
    %8 = vsyncpa [#allocation6], 0
    %9 = vsyncpa [#allocation4], 0
    // Predicated region
    $region2: #{tpu_custom_call.1} parent=1 // pred_check
      _
    $region3: #{tpu_custom_call.1} parent=1 // pred_check_branch
      %11 = sbr.rel (0) target = $region5
    $region4: #{tpu_custom_call.1} parent=1 // pred_region
      %s13 = ssub.s32 128, 128
      %14 = vsyncadd [#allocation3], %s13
      %s16 = sshll.u32 [#allocation2], 4
      %s17 = int_to_ptr.vmem [resolvable:$true] %s16
      %19 = dma.hbm_to_vmem [thread:$0]  %s0, 128, %s17, [#allocation3]
    $region5: #{tpu_custom_call.1} parent=1 // pred_fallthru
      _
    // Predicated region
    $region6: #{tpu_custom_call.1} parent=1 // pred_check
      _
    $region7: #{tpu_custom_call.1} parent=1 // pred_check_branch
      %21 = sbr.rel (0) target = $region9
    $region8: #{tpu_custom_call.1} parent=1 // pred_region
      %s23 = ssub.s32 1280, 1280
      %24 = vsyncadd [#allocation6], %s23
      %s25 = sshll.u32 [#allocation5], 4
      %s26 = int_to_ptr.vmem [resolvable:$true] %s25
      %31 = dma.hbm_to_vmem [thread:$0]  %s1, 1280, %s26, [#allocation6], 256, 256, 16
    $region9: #{tpu_custom_call.1} parent=1 // pred_fallthru
      _
    // Predicated region
    $region10: #{tpu_custom_call.1} parent=1 // pred_check
      _
    $region11: #{tpu_custom_call.1} parent=1 // pred_check_branch
      %33 = sbr.rel (0) target = $region13
    $region12: #{tpu_custom_call.1} parent=1 // pred_region
      %34 = dma.done [#allocation3], 128
    $region13: #{tpu_custom_call.1} parent=1 // pred_fallthru
      _
    // Predicated region
    $region14: #{tpu_custom_call.1} parent=1 // pred_check
      _
    $region15: #{tpu_custom_call.1} parent=1 // pred_check_branch
      %36 = sbr.rel (0) target = $region17
    $region16: #{tpu_custom_call.1} parent=1 // pred_region
      %37 = dma.done [#allocation6], 1280
    $region17: #{tpu_custom_call.1} parent=1 // pred_fallthru
      _
    %v38 = vld [vmem:[#allocation2] sm:$0xff]
    %v39 = vld [vmem:[#allocation5] sm:$0xff]
    %v40 = vld [vmem:[#allocation5 + $0x8] sm:$0xff]
    %v41 = vld [vmem:[#allocation5 + $0x10] sm:$0xff]
    %v42 = vld [vmem:[#allocation5 + $0x18] sm:$0xff]
    %v43 = vld [vmem:[#allocation5 + $0x20] sm:$0xff]
    %v44 = vld [vmem:[#allocation5 + $0x28] sm:$0xff]
    %v45 = vld [vmem:[#allocation5 + $0x30] sm:$0xff]
    %v46 = vld [vmem:[#allocation5 + $0x38] sm:$0xff]
    %v47 = vld [vmem:[#allocation5 + $0x40] sm:$0x3]
    %v48 = vld [vmem:[#allocation5 + $0x48] sm:$0x3]
    %vm49 = vcmask 277504
    %v51 = vsel %vm49, %v38, 0
    %vm53 = vcmask 1041408
    %v55 = vsel %vm53, %v47, 0
    %v58 = vsel %vm53, %v48, 0
    %60 = vmatprep.subr.mxu0 %v40
    %61 = vmatpush1.msra.mxu0 %v39
    %62 = vmatprep.subr.mxu0 %v42
    %63 = vmatpush1.msra.mxu0 %v41
    %64 = vmatprep.subr.mxu0 %v44
    %65 = vmatpush1.msra.mxu0 %v43
    %66 = vmatprep.subr.mxu0 %v46
    %67 = vmatpush1.msra.mxu0 %v45
    %68 = vmatprep.subr.mxu0 %v58
    %69 = vmatpush1.msra.mxu0 %v55
    %70 = vmatprep.subr.mxu0 0.0
    %71 = vmatpush1.msra.mxu0 0.0
    %72 = vmatprep.subr.mxu0 0.0
    %73 = vmatpush1.msra.mxu0 0.0
    %74 = vmatprep.subr.mxu0 0.0
    %75 = vmatpush1.msra.mxu0 0.0
    %76 = vmatprep.subr.mxu0 0.0
    %77 = vmatpush1.msra.mxu0 0.0
    %78 = vmatprep.subr.mxu0 0.0
    %79 = vmatpush1.msra.mxu0 0.0
    %80 = vmatprep.subr.mxu0 0.0
    %81 = vmatpush1.msra.mxu0 0.0
    %82 = vmatprep.subr.mxu0 0.0
    %83 = vmatpush1.msra.mxu0 0.0
    %84 = vmatprep.subr.mxu0 0.0
    %85 = vmatpush1.msra.mxu0 0.0
    %86 = vmatprep.subr.mxu0 0.0
    %87 = vmatpush1.msra.mxu0 0.0
    %88 = vmatprep.subr.mxu0 0.0
    %89 = vmatpush1.msra.mxu0 0.0
    %90 = vmatprep.subr.mxu0 0.0
    %91 = vmatpush1.msra.mxu0 0.0
    %92 = vmatprep.subr.mxu0 0.0
    %93 = vmatpush1.msra.mxu0 0.0
    %94 = vmatprep.subr.mxu0 0.0
    %95 = vmatpush1.msra.mxu0 0.0
    %96 = vmatprep.subr.mxu0 0.0
    %97 = vmatpush1.msra.mxu0 0.0
    %98 = vmatprep.subr.mxu0 0.0
    %99 = vmatpush1.msra.mxu0 0.0
    %100 = vmatprep.subr.mxu0 0.0
    %101 = vmatpush1.msra.mxu0 0.0
    %102 = vmatprep.subr.mxu0 0.0
    %103 = vmatpush1.msra.mxu0 0.0
    %104 = vmatprep.subr.mxu0 0.0
    %105 = vmatpush1.msra.mxu0 0.0
    %106 = vmatprep.subr.mxu0 0.0
    %107 = vmatpush1.msra.mxu0 0.0
    %108 = vmatprep.subr.mxu0 0.0
    %109 = vmatpush1.msra.mxu0 0.0
    %110 = vmatprep.subr.mxu0 0.0
    %111 = vmatpush1.msra.mxu0 0.0
    %112 = vmatprep.subr.mxu0 0.0
    %113 = vmatpush1.msra.mxu0 0.0
    %114 = vmatprep.subr.mxu0 0.0
    %115 = vmatpush1.msra.mxu0 0.0
    %116 = vmatprep.subr.mxu0 0.0
    %117 = vmatpush1.msra.mxu0 0.0
    %118 = vmatprep.subr.mxu0 0.0
    %119 = vmatpush1.msra.mxu0 0.0
    %120 = vmatprep.subr.mxu0 0.0
    %121 = vmatpush1.msra.mxu0 0.0
    %122 = vmatprep.subr.mxu0 0.0
    %123 = vmatpush1.msra.mxu0 0.0
    %124 = vmatprep.mubr.f32.mxu0 0.0
    %125 = vmatmul.mubr.f32.gmra.mrb[0].mxu0 %v51
    %v126 = vpop.f32.mrb[0].mxu0
    %v127 = vadd.f32 0.0, %v126
    %v128 = vpop.f32.mrb[0].mxu0
    %v129 = vadd.f32 0.0, %v128
    %130 = vdwg.mxu0
    %v131 = vmul.f32 %v127, 1.442695
    %v132 = vpow.pop %v131
    %v133 = vand.u32 2147483647, %v129
    %vm134 = vcmp.le.f32.partialorder %v133, 0.7853982
    %vm135 = vcmp.lt.s32.totalorder %v129, 0
    %v136 = vand.u32 %v129, 2139095040
    %v137 = vshrl.u32 %v136, 23
    %v138 = vsub.s32 %v137, 127
    %v139 = vand.u32 2147483647, %v129
    %v140 = vand.u32 %v139, 8388607
    %v141 = vor.u32 %v140, 8388608
    %v142 = vsub.s32 0, %v141
    %v143 = vadd.s32 %v138, 1
    %vm144 = vcmp.gt.s32.totalorder %v143, 0
    %v145 = vsel %vm144, %v143, 0
    %v146 = vshrl.u32 %v145, 5
    %v147 = vand.u32 %v145, 31
    %v148 = vsub.s32 32, %v147
    %v149 = vshrl.u32 683565275, %v148
    %v150 = vshll.u32 683565275, %v147
    %v151 = vshrl.u32 2475754826, %v148
    %v152 = vor.u32 %v150, %v151
    %v153 = vshll.u32 2475754826, %v147
    %v154 = vshrl.u32 2131351028, %v148
    %v155 = vor.u32 %v153, %v154
    %v156 = vshll.u32 2131351028, %v147
    %v157 = vshrl.u32 2102212464, %v148
    %v158 = vor.u32 %v156, %v157
    %v159 = vshll.u32 2102212464, %v147
    %v160 = vshrl.u32 920167782, %v148
    %v161 = vor.u32 %v159, %v160
    %v162 = vshll.u32 920167782, %v147
    %v163 = vshrl.u32 1326507024, %v148
    %v164 = vor.u32 %v162, %v163
    %vm165 = vcmp.lt.s32.totalorder %v146, 1
    %vm166 = vcmp.lt.s32.totalorder %v146, 2
    %vm167 = vcmp.lt.s32.totalorder %v146, 3
    %vm168 = vcmp.lt.s32.totalorder %v146, 4
    %v169 = vsel %vm165, %v149, %v152
    %v170 = vsel %vm168, %v158, 2102212464
    %v171 = vsel %vm167, %v155, %v170
    %v172 = vsel %vm166, %v169, %v171
    %v173 = vsel %vm165, %v152, %v155
    %v174 = vsel %vm168, %v161, 920167782
    %v175 = vsel %vm167, %v158, %v174
    %v176 = vsel %vm166, %v173, %v175
    %v177 = vsel %vm165, %v155, %v158
    %v178 = vsel %vm168, %v164, 1326507024
    %v179 = vsel %vm167, %v161, %v178
    %v180 = vsel %vm166, %v177, %v179
    %v181 = vshll.u32 %v141, 8
    %v182 = vmul.u32.u64.compose %v181, %v180
    %v183 = vextract.low.u32 %v182
    %v184 = vextract.high.u32 %v182
    %v185 = vmul.u32.u64.compose %v181, %v176
    %v186 = vextract.low.u32 %v185
    %v187 = vextract.high.u32 %v185
    %v188 = vmul.u32 %v181, %v172
    %v189 = vadd.s32 %v184, %v186
    %vm190 = vc.u32 %v184, %v186
    %v191 = vadd.s32 %v187, 1
    %v192 = vsel %vm190, %v191, %v187
    %v193 = vadd.s32 %v188, %v192
    %v194 = vadd.s32 %v193, 536870912
    %v195 = vshrl.u32 %v194, 30
    %v196 = vshll.u32 %v195, 30
    %v197 = vsub.s32 %v193, %v196
    %vm198 = vcmp.lt.s32.totalorder %v197, 0
    %v199 = vsub.s32 0, %v197
    %v200 = vsel %vm198, %v199, %v197
    %v201 = vclz %v200
    %v202 = vsub.s32 %v201, 2
    %vm203 = vcmp.gt.s32.totalorder 0, %v202
    %v204 = vsel %vm203, 0, %v202
    %v205 = vsub.s32 32, %v204
    %v206 = vshll.u32 %v197, %v204
    %v207 = vshrl.u32 %v189, %v205
    %v208 = vor.u32 %v206, %v207
    %v209 = vsub.s32 4294967266, %v204
    %v210 = vadd.s32 %v209, 127
    %v211 = vshll.u32 %v210, 23
    %v212 = vor.u32 4788187, %v211
    %v213 = vand.u32 2147483647, %v212
    %v215 = vcvt.s32.f32 %v208
    %v216 = vmul.f32 %v215, %v213
    %v217 = vxor.u32 %v216, 2147483648
    %v218 = vsel %vm135, %v217, %v216
    %v219 = vsub.s32 4, %v195
    %v220 = vsel %vm135, %v219, %v195
    %v221 = vsel %vm134, %v129, %v218
    %v222 = vsel %vm134, 0, %v220
    %v223 = vcosq.f32.pop %v221
    %v224 = vsinq.f32.pop %v221
    %vm225 = vweird.f32 %v129
    %v226 = vadd.s32 %v222, 3
    %v227 = vand.u32 %v226, 3
    %vm228 = vcmp.lt.s32.totalorder %v227, 2
    %vm229 = vcmp.eq.s32.totalorder %v227, 0
    %v230 = vxor.u32 %v224, 2147483648
    %v231 = vsel %vm229, %v223, %v230
    %vm232 = vcmp.eq.s32.totalorder %v227, 2
    %v233 = vxor.u32 %v223, 2147483648
    %v234 = vsel %vm232, %v233, %v224
    %v235 = vsel %vm228, %v231, %v234
    %v236 = vsel %vm225, nan, %v235
    %v237 = vmul.f32 %v132, %v236
    %238 = vst [vmem:[#allocation7] sm:$0xff] %v237
    // Predicated region
    $region18: #{tpu_custom_call.1} parent=1 // pred_check
      _
    $region19: #{tpu_custom_call.1} parent=1 // pred_check_branch
      %240 = sbr.rel (0) target = $region21
    $region20: #{tpu_custom_call.1} parent=1 // pred_region
      %s242 = ssub.s32 128, 128
      %243 = vsyncadd [#allocation4], %s242
      %s245 = sshll.u32 [#allocation7], 4
      %s246 = int_to_ptr.vmem [resolvable:$true] %s245
      %248 = dma.vmem_to_hbm [thread:$0]  %s246, 128, %s2, [#allocation4]
    $region21: #{tpu_custom_call.1} parent=1 // pred_fallthru
      _
    // Predicated region
    $region22: #{tpu_custom_call.1} parent=1 // pred_check
      _
    $region23: #{tpu_custom_call.1} parent=1 // pred_check_branch
      %250 = sbr.rel (0) target = $region25
    $region24: #{tpu_custom_call.1} parent=1 // pred_region
      %251 = dma.done [#allocation4], 128
    $region25: #{tpu_custom_call.1} parent=1 // pred_fallthru
      _
    %252 = vsyncpa [#allocation3], 1
    %253 = vsyncpa [#allocation6], 1
    %254 = vsyncpa [#allocation4], 1

</llo_original>
